<compile_context>
chip_gen: v7x
topology: tpu7x:2x2x1
jax: 0.10.0
libtpu: 0.0.40
codegen_flags: <defaults>
</compile_context>

<pallas_src>
import math

import jax
import jax.numpy as jnp
from jax.experimental import pallas as pl
from jax.experimental.pallas import tpu as pltpu

_MAX_BLOCK_ROWS = 1024
_TARGET_BLOCK_BYTES = 2 * 1024 * 1024   # per-operand, per-pipeline-buffer budget


def _round_up(a, b):
    return -(-a // b) * b


# ----------------------------------------------------------------------------
# Pallas kernel: rotary combine on a (block_rows, D) row tile.
# ----------------------------------------------------------------------------
def _rope_kernel(x_ref, pos_ref, div_ref, o_ref):
    x = x_ref[...].astype(jnp.float32)            # (R, D) native dtype -> f32
    d = x.shape[-1]
    dh = d // 2

    # Angles: (R,1) * (1,Dh) -> (R,Dh); sin/cos run on the VPU and hide under
    # the HBM-bound DMA stream (no cos/sin tables are streamed from HBM).
    ang = pos_ref[...] * div_ref[...]
    c = jnp.cos(ang)
    s = jnp.sin(ang)

    x0 = x[:, :dh]
    x1 = x[:, dh:]
    # first half:  x0 * cos + (-x1) * sin ; second half: x1 * cos + x0 * sin
    o0 = x0 * c - x1 * s
    o1 = x1 * c + x0 * s
    o_ref[...] = jnp.concatenate([o0, o1], axis=-1).astype(o_ref.dtype)


# ----------------------------------------------------------------------------
# div_term constant (matches the torch buffer construction; the cos/sin
# tables themselves are never materialized — angles are computed in-kernel).
# ----------------------------------------------------------------------------
def make_rope_div_term(model_dim, temperature=10000.0):
    assert model_dim % 2 == 0, "model_dim must be a multiple of 2"
    return jnp.exp(
        jnp.arange(0, model_dim, 2, dtype=jnp.float32)
        * (-math.log(temperature) / model_dim))


# ----------------------------------------------------------------------------
# Wrapper: flatten to (N, D), pick row tiling, call the kernel.
# ----------------------------------------------------------------------------
def rotary_positional_embedding_1d(x, pos, div_term_half):
    orig_shape = x.shape
    d = orig_shape[-1]
    assert d % 2 == 0, "model_dim must be a multiple of 2"
    dh = d // 2
    lead = orig_shape[:-1]
    n = math.prod(lead) if lead else 1

    # Accept broadcastable pos (e.g. (S,) with x (B, S, D)), like the module.
    pos_b = jnp.broadcast_to(pos, lead)

    x2d = x.reshape(n, d)                          # native dtype (no upcast)
    pos_col = pos_b.reshape(n, 1).astype(jnp.float32)
    div_row = div_term_half.reshape(1, dh).astype(jnp.float32)

    itemsize = jnp.dtype(x2d.dtype).itemsize
    row_align = 16 if itemsize == 2 else 8         # bf16 sublane packing

    # Row-tile size: as big as the per-operand VMEM budget allows, capped at
    # _MAX_BLOCK_ROWS, never bigger than the (row-aligned) problem.
    vmem_rows = max(row_align,
                    (_TARGET_BLOCK_BYTES // max(1, d * itemsize))
                    // row_align * row_align)
    block_rows = min(_MAX_BLOCK_ROWS, vmem_rows, _round_up(n, row_align))
    # Guarantee >= 2 grid steps when possible so ("parallel",) actually shards
    # row tiles across both v7x TensorCores.
    if n > row_align:
        block_rows = min(block_rows, _round_up(pl.cdiv(n, 2), row_align))
    block_rows = max(row_align, (block_rows // row_align) * row_align)

    grid = (pl.cdiv(n, block_rows),)

    out2d = pl.pallas_call(
        _rope_kernel,
        out_shape=jax.ShapeDtypeStruct((n, d), x2d.dtype),
        grid_spec=pltpu.PrefetchScalarGridSpec(
            num_scalar_prefetch=0,
            grid=grid,
            in_specs=[
                pl.BlockSpec((block_rows, d), lambda i: (i, 0)),   # x rows
                pl.BlockSpec((block_rows, 1), lambda i: (i, 0)),   # positions
                pl.BlockSpec((1, dh), lambda i: (0, 0)),           # div_term
            ],
            out_specs=pl.BlockSpec((block_rows, d), lambda i: (i, 0)),
        ),
        compiler_params=pltpu.CompilerParams(
            dimension_semantics=("parallel",)),
        input_output_aliases={0: 0},
    )(x2d, pos_col, div_row)

    return out2d.reshape(orig_shape)


# ----------------------------------------------------------------------------
# Pure-JAX reference (direct transcription of the torch module) for checking.
# TODO(synk): torch would raise on pos >= max_seq_length (table indexing); the
# kernel computes angles directly from pos, so out-of-range positions simply
# extrapolate instead of erroring.
# ----------------------------------------------------------------------------
def _rope_reference(x, pos, model_dim, max_seq_length=1200, temperature=10000.0):
    positions = jnp.arange(max_seq_length, dtype=jnp.float32)[:, None]
    div_term = jnp.exp(
        jnp.arange(0, model_dim, 2, dtype=jnp.float32)
        * (-math.log(temperature) / model_dim))
    ang = positions * div_term
    sin_full = jnp.concatenate([jnp.sin(ang), jnp.sin(ang)], axis=-1)[pos]
    cos_full = jnp.concatenate([jnp.cos(ang), jnp.cos(ang)], axis=-1)[pos]
    dh = model_dim // 2
    inv_neg = jnp.concatenate([-x[..., dh:], x[..., :dh]], axis=-1)
    return x * cos_full + inv_neg * sin_full


if __name__ == "__main__":
    B, S, D = 2, 8, 32                 # small shapes consistent with the module
    max_seq_length = 1200

    key = jax.random.PRNGKey(0)
    kx, kp = jax.random.split(key)
    x = jax.random.normal(kx, (B, S, D), jnp.float32)
    pos = jax.random.randint(kp, (B, S), 0, max_seq_length)

    div_term_half = make_rope_div_term(D)

    rope = jax.jit(rotary_positional_embedding_1d)
    out = rope(x, pos, div_term_half)
    jax.block_until_ready(out)

    ref = _rope_reference(x, pos, D, max_seq_length)
    assert out.shape == (B, S, D) and out.dtype == x.dtype
    assert bool(jnp.allclose(out, ref, atol=1e-5, rtol=1e-5)), "mismatch vs reference"
    print("KERNEL_OK")
</pallas_src>

<mosaic_0001>
module attributes {stable_mosaic.version = 11 : i64} {
  func.func @_rope_kernel(%arg0: i32, %arg1: memref<8x32xf32, #tpu.memory_space<vmem>>, %arg2: memref<8x1xf32, #tpu.memory_space<vmem>>, %arg3: memref<1x16xf32, #tpu.memory_space<vmem>>, %arg4: memref<8x32xf32, #tpu.memory_space<vmem>>) attributes {dimension_semantics = [#tpu.dimension_semantics<parallel>], iteration_bounds = array<i64: 2>, scalar_prefetch = 0 : i64, scratch_operands = 0 : i64, tpu.core_type = #tpu.core_type<tc>, window_params = [{transform_indices = @transform_0, window_bounds = array<i64: 8, 32>}, {transform_indices = @transform_1, window_bounds = array<i64: 8, 1>}, {pipeline_mode = #tpu.pipeline_mode<synchronous>, transform_indices = @transform_2, window_bounds = array<i64: 1, 16>}, {transform_indices = @transform_3, window_bounds = array<i64: 8, 32>}]} {
    %c0 = arith.constant 0 : index
    %c0_0 = arith.constant 0 : index
    %0 = vector.load %arg1[%c0, %c0_0] : memref<8x32xf32, #tpu.memory_space<vmem>>, vector<8x32xf32>
    %c0_1 = arith.constant 0 : index
    %c0_2 = arith.constant 0 : index
    %1 = vector.load %arg2[%c0_1, %c0_2] : memref<8x1xf32, #tpu.memory_space<vmem>>, vector<8x1xf32>
    %c0_3 = arith.constant 0 : index
    %c0_4 = arith.constant 0 : index
    %2 = vector.load %arg3[%c0_3, %c0_4] : memref<1x16xf32, #tpu.memory_space<vmem>>, vector<1x16xf32>
    %3 = vector.broadcast %1 : vector<8x1xf32> to vector<8x16xf32>
    %4 = vector.broadcast %2 : vector<1x16xf32> to vector<8x16xf32>
    %5 = arith.mulf %3, %4 : vector<8x16xf32>
    %6 = math.cos %5 : vector<8x16xf32>
    %7 = math.sin %5 : vector<8x16xf32>
    %8 = vector.extract_strided_slice %0 {offsets = [0, 0], sizes = [8, 16], strides = [1, 1]} : vector<8x32xf32> to vector<8x16xf32>
    %9 = vector.extract_strided_slice %0 {offsets = [0, 16], sizes = [8, 16], strides = [1, 1]} : vector<8x32xf32> to vector<8x16xf32>
    %10 = arith.mulf %8, %6 : vector<8x16xf32>
    %11 = arith.mulf %9, %7 : vector<8x16xf32>
    %12 = arith.subf %10, %11 : vector<8x16xf32>
    %13 = arith.mulf %9, %6 : vector<8x16xf32>
    %14 = arith.mulf %8, %7 : vector<8x16xf32>
    %15 = arith.addf %13, %14 : vector<8x16xf32>
    %16 = tpu.concatenate %12, %15 in 1 : vector<8x16xf32>, vector<8x16xf32> -> vector<8x32xf32>
    %c0_5 = arith.constant 0 : index
    %c0_6 = arith.constant 0 : index
    %17 = vector.load %arg4[%c0_5, %c0_6] : memref<8x32xf32, #tpu.memory_space<vmem>>, vector<8x32xf32>
    tpu.vector_store %arg4[%c0_5, %c0_6], %16 {strides = array<i32>} : memref<8x32xf32, #tpu.memory_space<vmem>>, vector<8x32xf32>,
    return
  }
  func.func @transform_0(%arg0: i32) -> (i32, i32) {
    %c0_i32 = arith.constant 0 : i32
    %c0_i32_0 = arith.constant 0 : i32
    return %arg0, %c0_i32 : i32, i32
  }
  func.func @transform_1(%arg0: i32) -> (i32, i32) {
    %c0_i32 = arith.constant 0 : i32
    %c0_i32_0 = arith.constant 0 : i32
    return %arg0, %c0_i32 : i32, i32
  }
  func.func @transform_2(%arg0: i32) -> (i32, i32) {
    %c0_i32 = arith.constant 0 : i32
    %c0_i32_0 = arith.constant 0 : i32
    %c0_i32_1 = arith.constant 0 : i32
    return %c0_i32, %c0_i32_0 : i32, i32
  }
  func.func @transform_3(%arg0: i32) -> (i32, i32) {
    %c0_i32 = arith.constant 0 : i32
    %c0_i32_0 = arith.constant 0 : i32
    return %arg0, %c0_i32 : i32, i32
  }
}

</mosaic_0001>

<llo_original>
// kernel: rotary_positional_embedding_1d.1
$region0: #{rotary_positional_embedding_1d.1}
  #allocation0 [shape = 'u32[]', space=smem, size = 0x4, offset = 0x4, fixed_abs, tag = 'smem constant byte address 0x4 - core index']
  #allocation1 [shape = 'u32[144,128]{1,0:T(1,128)}', space=vmem, size = 0x12000, scoped, tag = 'internal scratch']
  %s0 = inlined_call_operand.vmem [shape: f32[16,32], index: 0, kind: input, shape index: {}, may-alias: {0,3}]
  %s1 = inlined_call_operand.vmem [shape: f32[16,1], index: 1, kind: input, shape index: {}]
  %s2 = inlined_call_operand.vmem [shape: f32[1,16], index: 2, kind: input, shape index: {}]
  %s3 = inlined_call_operand.vmem [shape: f32[16,32], index: 3, kind: output, shape index: {}, may-alias: {0,3}]
  %s4 = sld [smem:[#allocation0]]
  $region45: #{rotary_positional_embedding_1d.1} parent=0
    _
  %s6 = ssub.s32 1, %s4
  %s7 = scalar_select 0, %s6, %s4
  loop: start=0, step=1, limit=4
  $region2: #{rotary_positional_embedding_1d.1} parent=0 // loop_pre_header
    _
  $region3: #{rotary_positional_embedding_1d.1} parent=0 // loop_header
    %s9 = sphi 0, %s13
    %p10 = scmp.ge.s32.totalorder %s9, 4
    %s19 = sphi 0, %s21
    %s22 = sphi 0, %s19
    %s23 = sphi 0, %s22
    %s39 = sphi 0, %s23
    %s45 = sphi 0, %s47
    %s48 = sphi 0, %s45
    %s49 = sphi 0, %s48
    %s65 = sphi 0, %s49
    %s69 = sphi 0, %s69
    %s71 = sphi 0, %s69
    %s72 = sphi 0, %s71
    %s86 = sphi 0, %s72
    %s92 = sphi 0, %s94
    %s95 = sphi 0, %s92
    %s96 = sphi 0, %s95
    %s112 = sphi 0, %s96
  $region4: #{rotary_positional_embedding_1d.1} parent=0 // loop_header_branch
    %12 = sbr.rel (%p10) target = $region8
  $region5: #{rotary_positional_embedding_1d.1} parent=0 // loop_body
    %s14 = ssub.s32 %s9, 1
    %s15 = ssub.s32 %s9, 2
    %s16 = sadd.s32 %s9, 1
    %s17 = ssub.s32 %s9, %s16
    %p18 = scmp.eq.s32.totalorder %s17, 0
    %s20 = sadd.s32 %s19, 1
    %s21 = scalar_select %p18, %s19, %s20
    %p24 = pneg %p18
    %p25 = scmp.eq.s32.totalorder %s9, 1
    %p26 = por %p24, %p25
    %p27 = scmp.ne.s32.totalorder %s19, %s22
    %p28 = scmp.eq.s32.totalorder %s9, 0
    %p29 = por %p27, %p28
    %p30 = scmp.ne.s32.totalorder %s19, %s22
    %p31 = scmp.eq.s32.totalorder %s14, 1
    %p32 = por %p30, %p31
    %p33 = scmp.ne.s32.totalorder %s22, %s23
    %p34 = scmp.eq.s32.totalorder %s14, 0
    %p35 = por %p33, %p34
    %p36 = scmp.ne.s32.totalorder %s22, %s23
    %p37 = scmp.eq.s32.totalorder %s15, 1
    %p38 = por %p36, %p37
    %p40 = scmp.ne.s32.totalorder %s23, %s39
    %p41 = scmp.eq.s32.totalorder %s15, 0
    %p42 = por %p40, %p41
    %s43 = ssub.s32 %s9, %s16
    %p44 = scmp.eq.s32.totalorder %s43, 0
    %s46 = sadd.s32 %s45, 1
    %s47 = scalar_select %p44, %s45, %s46
    %p50 = pneg %p44
    %p51 = scmp.eq.s32.totalorder %s9, 1
    %p52 = por %p50, %p51
    %p53 = scmp.ne.s32.totalorder %s45, %s48
    %p54 = scmp.eq.s32.totalorder %s9, 0
    %p55 = por %p53, %p54
    %p56 = scmp.ne.s32.totalorder %s45, %s48
    %p57 = scmp.eq.s32.totalorder %s14, 1
    %p58 = por %p56, %p57
    %p59 = scmp.ne.s32.totalorder %s48, %s49
    %p60 = scmp.eq.s32.totalorder %s14, 0
    %p61 = por %p59, %p60
    %p62 = scmp.ne.s32.totalorder %s48, %s49
    %p63 = scmp.eq.s32.totalorder %s15, 1
    %p64 = por %p62, %p63
    %p66 = scmp.ne.s32.totalorder %s49, %s65
    %p67 = scmp.eq.s32.totalorder %s15, 0
    %p68 = por %p66, %p67
    %s70 = sadd.s32 %s69, 1
    %p73 = scmp.eq.s32.totalorder %s9, 1
    %p74 = scmp.ne.s32.totalorder %s69, %s71
    %p75 = scmp.eq.s32.totalorder %s9, 0
    %p76 = por %p74, %p75
    %p77 = scmp.ne.s32.totalorder %s69, %s71
    %p78 = scmp.eq.s32.totalorder %s14, 1
    %p79 = por %p77, %p78
    %p80 = scmp.ne.s32.totalorder %s71, %s72
    %p81 = scmp.eq.s32.totalorder %s14, 0
    %p82 = por %p80, %p81
    %p83 = scmp.ne.s32.totalorder %s71, %s72
    %p84 = scmp.eq.s32.totalorder %s15, 1
    %p85 = por %p83, %p84
    %p87 = scmp.ne.s32.totalorder %s72, %s86
    %p88 = scmp.eq.s32.totalorder %s15, 0
    %p89 = por %p87, %p88
    %s90 = ssub.s32 %s9, %s16
    %p91 = scmp.eq.s32.totalorder %s90, 0
    %s93 = sadd.s32 %s92, 1
    %s94 = scalar_select %p91, %s92, %s93
    %p97 = pneg %p91
    %p98 = scmp.eq.s32.totalorder %s9, 1
    %p99 = por %p97, %p98
    %p100 = scmp.ne.s32.totalorder %s92, %s95
    %p101 = scmp.eq.s32.totalorder %s9, 0
    %p102 = por %p100, %p101
    %p103 = scmp.ne.s32.totalorder %s92, %s95
    %p104 = scmp.eq.s32.totalorder %s14, 1
    %p105 = por %p103, %p104
    %p106 = scmp.ne.s32.totalorder %s95, %s96
    %p107 = scmp.eq.s32.totalorder %s14, 0
    %p108 = por %p106, %p107
    %p109 = scmp.ne.s32.totalorder %s95, %s96
    %p110 = scmp.eq.s32.totalorder %s15, 1
    %p111 = por %p109, %p110
    %p113 = scmp.ne.s32.totalorder %s96, %s112
    %p114 = scmp.eq.s32.totalorder %s15, 0
    %p115 = por %p113, %p114
    %p116 = scmp.le.s32.totalorder 1, %s9
    %p117 = scmp.lt.s32.totalorder %s9, 3
    %p118 = pnand %p116, %p117
    %p119 = pneg %p118
    // Predicated region
    $region9: #{rotary_positional_embedding_1d.1} parent=5 // pred_check
      _
    $region10: #{rotary_positional_embedding_1d.1} parent=5 // pred_check_branch
      %121 = sbr.rel (%p118) target = $region12
    $region11: #{rotary_positional_embedding_1d.1} parent=5 // pred_region
      %s122 = ssub.s32 %s9, 1
      // Predicated region
      $region13: #{rotary_positional_embedding_1d.1} parent=11 // pred_check
        %p123 = pneg %p82
      $region14: #{rotary_positional_embedding_1d.1} parent=11 // pred_check_branch
        %125 = sbr.rel (%p123) target = $region16
      $region15: #{rotary_positional_embedding_1d.1} parent=11 // pred_region
        _
      $region16: #{rotary_positional_embedding_1d.1} parent=11 // pred_fallthru
        _
    $region12: #{rotary_positional_embedding_1d.1} parent=5 // pred_fallthru
      _
    %p126 = scmp.lt.s32.totalorder %s9, 2
    // Predicated region
    $region17: #{rotary_positional_embedding_1d.1} parent=5 // pred_check
      %p127 = pneg %p126
    $region18: #{rotary_positional_embedding_1d.1} parent=5 // pred_check_branch
      %129 = sbr.rel (%p127) target = $region20
    $region19: #{rotary_positional_embedding_1d.1} parent=5 // pred_region
      // Predicated region
      $region21: #{rotary_positional_embedding_1d.1} parent=19 // pred_check
        %p130 = pneg %p29
      $region22: #{rotary_positional_embedding_1d.1} parent=19 // pred_check_branch
        %132 = sbr.rel (%p130) target = $region24
      $region23: #{rotary_positional_embedding_1d.1} parent=19 // pred_region
        %p133 = scmp.lt.s32.totalorder %s9, 1
        %s134 = scalar_select %p133, %s9, 1
        %s135 = smul.addr %s134, 8
        %s136 = scalar_lea.vmem %s0, %s135
      $region24: #{rotary_positional_embedding_1d.1} parent=19 // pred_fallthru
        _
      // Predicated region
      $region25: #{rotary_positional_embedding_1d.1} parent=19 // pred_check
        %p137 = pneg %p55
      $region26: #{rotary_positional_embedding_1d.1} parent=19 // pred_check_branch
        %139 = sbr.rel (%p137) target = $region28
      $region27: #{rotary_positional_embedding_1d.1} parent=19 // pred_region
        %p140 = scmp.lt.s32.totalorder %s9, 1
        %s141 = scalar_select %p140, %s9, 1
        %s142 = smul.addr %s141, 8
        %s143 = scalar_lea.vmem %s1, %s142
      $region28: #{rotary_positional_embedding_1d.1} parent=19 // pred_fallthru
        _
    $region20: #{rotary_positional_embedding_1d.1} parent=5 // pred_fallthru
      _
    %p144 = scmp.le.s32.totalorder 1, %s9
    %p145 = scmp.lt.s32.totalorder %s9, 3
    %p146 = pnand %p144, %p145
    %p147 = pneg %p146
    // Predicated region
    $region29: #{rotary_positional_embedding_1d.1} parent=5 // pred_check
      _
    $region30: #{rotary_positional_embedding_1d.1} parent=5 // pred_check_branch
      %149 = sbr.rel (%p146) target = $region32
    $region31: #{rotary_positional_embedding_1d.1} parent=5 // pred_region
      %s150 = ssub.s32 %s9, 1
      %p151 = scmp.lt.s32.totalorder %s14, 1
      %s152 = scalar_select %p151, %s14, 1
      %s153 = smul.addr %s152, 8
      %s154 = scalar_lea.vmem %s0, %s153
      %p155 = pneg %p35
      %p156 = pneg %p32
      %p157 = scmp.lt.s32.totalorder %s14, 1
      %s158 = scalar_select %p157, %s14, 1
      %s159 = smul.addr %s158, 8
      %s160 = scalar_lea.vmem %s1, %s159
      %p161 = pneg %p61
      %p162 = pneg %p58
      %p163 = pneg %p82
      %p164 = pneg %p79
      %p165 = pneg %p108
      %p166 = pneg %p105
      %p167 = scmp.lt.s32.totalorder %s14, 1
      %s168 = scalar_select %p167, %s14, 1
      %s169 = smul.addr %s168, 8
      %s170 = scalar_lea.vmem %s3, %s169
      %p171 = scmp.lt.s32.totalorder %s14, 1
      %s172 = scalar_select %p171, %s14, 1
      %s173 = smul.addr %s172, 8
      %s174 = scalar_lea.vmem %s0, %s173
      %p175 = scmp.lt.s32.totalorder %s14, 1
      %s176 = scalar_select %p175, %s14, 1
      %s177 = smul.addr %s176, 8
      %s178 = scalar_lea.vmem %s1, %s177
      %p179 = scmp.lt.s32.totalorder %s14, 1
      %s180 = scalar_select %p179, %s14, 1
      %s181 = smul.addr %s180, 8
      %s182 = scalar_lea.vmem %s3, %s181
      %v183 = vld [vmem:[%s174] sm:$0xff]
      %v184 = vld [vmem:[%s178] sm:$0xff]
      %v185 = vld [vmem:[%s2] sm:$0x1]
      %187 = vset.pattern.permute.xlu0 0
      %188 = vperm.xlu0 %187, %v184
      %v189 = vpop.permute.xlu0 %188
      %v192 = vlaneseq
      %v193 = vshrl.u32 %v192, 7
      %v194 = vsub.s32 0, %v193
      %v195 = vrot.slane %v185, %v194
      %v197 = vmul.f32 %v189, %v195
      %v198 = vand.u32 2147483647, %v197
      %vm199 = vcmp.le.f32.partialorder %v198, 0.7853982
      %vm200 = vcmp.lt.s32.totalorder %v197, 0
      %v201 = vand.u32 %v197, 2139095040
      %v202 = vshrl.u32 %v201, 23
      %v203 = vsub.s32 %v202, 127
      %v204 = vand.u32 2147483647, %v197
      %v205 = vand.u32 %v204, 8388607
      %v206 = vor.u32 %v205, 8388608
      %v207 = vsub.s32 0, %v206
      %v208 = vadd.s32 %v203, 1
      %vm209 = vcmp.gt.s32.totalorder %v208, 0
      %v210 = vsel %vm209, %v208, 0
      %v211 = vshrl.u32 %v210, 5
      %v212 = vand.u32 %v210, 31
      %v213 = vsub.s32 32, %v212
      %v214 = vshrl.u32 683565275, %v213
      %v215 = vshll.u32 683565275, %v212
      %v216 = vshrl.u32 2475754826, %v213
      %v217 = vor.u32 %v215, %v216
      %v218 = vshll.u32 2475754826, %v212
      %v219 = vshrl.u32 2131351028, %v213
      %v220 = vor.u32 %v218, %v219
      %v221 = vshll.u32 2131351028, %v212
      %v222 = vshrl.u32 2102212464, %v213
      %v223 = vor.u32 %v221, %v222
      %v224 = vshll.u32 2102212464, %v212
      %v225 = vshrl.u32 920167782, %v213
      %v226 = vor.u32 %v224, %v225
      %v227 = vshll.u32 920167782, %v212
      %v228 = vshrl.u32 1326507024, %v213
      %v229 = vor.u32 %v227, %v228
      %vm230 = vcmp.lt.s32.totalorder %v211, 1
      %vm231 = vcmp.lt.s32.totalorder %v211, 2
      %vm232 = vcmp.lt.s32.totalorder %v211, 3
      %vm233 = vcmp.lt.s32.totalorder %v211, 4
      %v234 = vsel %vm230, %v214, %v217
      %v235 = vsel %vm233, %v223, 2102212464
      %v236 = vsel %vm232, %v220, %v235
      %v237 = vsel %vm231, %v234, %v236
      %v238 = vsel %vm230, %v217, %v220
      %v239 = vsel %vm233, %v226, 920167782
      %v240 = vsel %vm232, %v223, %v239
      %v241 = vsel %vm231, %v238, %v240
      %v242 = vsel %vm230, %v220, %v223
      %v243 = vsel %vm233, %v229, 1326507024
      %v244 = vsel %vm232, %v226, %v243
      %v245 = vsel %vm231, %v242, %v244
      %v246 = vshll.u32 %v206, 8
      %v247 = vmul.u32.u64.compose %v246, %v245
      %v248 = vextract.low.u32 %v247
      %v249 = vextract.high.u32 %v247
      %v250 = vmul.u32.u64.compose %v246, %v241
      %v251 = vextract.low.u32 %v250
      %v252 = vextract.high.u32 %v250
      %v253 = vmul.u32 %v246, %v237
      %v254 = vadd.s32 %v249, %v251
      %vm255 = vc.u32 %v249, %v251
      %v256 = vadd.s32 %v252, 1
      %v257 = vsel %vm255, %v256, %v252
      %v258 = vadd.s32 %v253, %v257
      %v259 = vadd.s32 %v258, 536870912
      %v260 = vshrl.u32 %v259, 30
      %v261 = vshll.u32 %v260, 30
      %v262 = vsub.s32 %v258, %v261
      %vm263 = vcmp.lt.s32.totalorder %v262, 0
      %v264 = vsub.s32 0, %v262
      %v265 = vsel %vm263, %v264, %v262
      %v266 = vclz %v265
      %v267 = vsub.s32 %v266, 2
      %vm268 = vcmp.gt.s32.totalorder 0, %v267
      %v269 = vsel %vm268, 0, %v267
      %v270 = vsub.s32 32, %v269
      %v271 = vshll.u32 %v262, %v269
      %v272 = vshrl.u32 %v254, %v270
      %v273 = vor.u32 %v271, %v272
      %v274 = vsub.s32 4294967266, %v269
      %v275 = vadd.s32 %v274, 127
      %v276 = vshll.u32 %v275, 23
      %v277 = vor.u32 4788187, %v276
      %v278 = vand.u32 2147483647, %v277
      %v280 = vcvt.s32.f32 %v273
      %v281 = vmul.f32 %v280, %v278
      %v282 = vxor.u32 %v281, 2147483648
      %v283 = vsel %vm200, %v282, %v281
      %v284 = vsub.s32 4, %v260
      %v285 = vsel %vm200, %v284, %v260
      %v286 = vsel %vm199, %v197, %v283
      %v287 = vsel %vm199, 0, %v285
      %v288 = vcosq.f32.pop %v286
      %v289 = vsinq.f32.pop %v286
      %vm290 = vweird.f32 %v197
      %v291 = vand.u32 %v287, 3
      %vm292 = vcmp.lt.s32.totalorder %v291, 2
      %vm293 = vcmp.eq.s32.totalorder %v291, 0
      %v294 = vxor.u32 %v289, 2147483648
      %v295 = vsel %vm293, %v288, %v294
      %vm296 = vcmp.eq.s32.totalorder %v291, 2
      %v297 = vxor.u32 %v288, 2147483648
      %v298 = vsel %vm296, %v297, %v289
      %v299 = vsel %vm292, %v295, %v298
      %v300 = vsel %vm290, nan, %v299
      %v301 = vand.u32 2147483647, %v197
      %vm302 = vcmp.le.f32.partialorder %v301, 0.7853982
      %vm303 = vcmp.lt.s32.totalorder %v197, 0
      %v304 = vand.u32 %v197, 2139095040
      %v305 = vshrl.u32 %v304, 23
      %v306 = vsub.s32 %v305, 127
      %v307 = vand.u32 2147483647, %v197
      %v308 = vand.u32 %v307, 8388607
      %v309 = vor.u32 %v308, 8388608
      %v310 = vsub.s32 0, %v309
      %v311 = vadd.s32 %v306, 1
      %vm312 = vcmp.gt.s32.totalorder %v311, 0
      %v313 = vsel %vm312, %v311, 0
      %v314 = vshrl.u32 %v313, 5
      %v315 = vand.u32 %v313, 31
      %v316 = vsub.s32 32, %v315
      %v317 = vshrl.u32 683565275, %v316
      %v318 = vshll.u32 683565275, %v315
      %v319 = vshrl.u32 2475754826, %v316
      %v320 = vor.u32 %v318, %v319
      %v321 = vshll.u32 2475754826, %v315
      %v322 = vshrl.u32 2131351028, %v316
      %v323 = vor.u32 %v321, %v322
      %v324 = vshll.u32 2131351028, %v315
      %v325 = vshrl.u32 2102212464, %v316
      %v326 = vor.u32 %v324, %v325
      %v327 = vshll.u32 2102212464, %v315
      %v328 = vshrl.u32 920167782, %v316
      %v329 = vor.u32 %v327, %v328
      %v330 = vshll.u32 920167782, %v315
      %v331 = vshrl.u32 1326507024, %v316
      %v332 = vor.u32 %v330, %v331
      %vm333 = vcmp.lt.s32.totalorder %v314, 1
      %vm334 = vcmp.lt.s32.totalorder %v314, 2
      %vm335 = vcmp.lt.s32.totalorder %v314, 3
      %vm336 = vcmp.lt.s32.totalorder %v314, 4
      %v337 = vsel %vm333, %v317, %v320
      %v338 = vsel %vm336, %v326, 2102212464
      %v339 = vsel %vm335, %v323, %v338
      %v340 = vsel %vm334, %v337, %v339
      %v341 = vsel %vm333, %v320, %v323
      %v342 = vsel %vm336, %v329, 920167782
      %v343 = vsel %vm335, %v326, %v342
      %v344 = vsel %vm334, %v341, %v343
      %v345 = vsel %vm333, %v323, %v326
      %v346 = vsel %vm336, %v332, 1326507024
      %v347 = vsel %vm335, %v329, %v346
      %v348 = vsel %vm334, %v345, %v347
      %v349 = vshll.u32 %v309, 8
      %v350 = vmul.u32.u64.compose %v349, %v348
      %v351 = vextract.low.u32 %v350
      %v352 = vextract.high.u32 %v350
      %v353 = vmul.u32.u64.compose %v349, %v344
      %v354 = vextract.low.u32 %v353
      %v355 = vextract.high.u32 %v353
      %v356 = vmul.u32 %v349, %v340
      %v357 = vadd.s32 %v352, %v354
      %vm358 = vc.u32 %v352, %v354
      %v359 = vadd.s32 %v355, 1
      %v360 = vsel %vm358, %v359, %v355
      %v361 = vadd.s32 %v356, %v360
      %v362 = vadd.s32 %v361, 536870912
      %v363 = vshrl.u32 %v362, 30
      %v364 = vshll.u32 %v363, 30
      %v365 = vsub.s32 %v361, %v364
      %vm366 = vcmp.lt.s32.totalorder %v365, 0
      %v367 = vsub.s32 0, %v365
      %v368 = vsel %vm366, %v367, %v365
      %v369 = vclz %v368
      %v370 = vsub.s32 %v369, 2
      %vm371 = vcmp.gt.s32.totalorder 0, %v370
      %v372 = vsel %vm371, 0, %v370
      %v373 = vsub.s32 32, %v372
      %v374 = vshll.u32 %v365, %v372
      %v375 = vshrl.u32 %v357, %v373
      %v376 = vor.u32 %v374, %v375
      %v377 = vsub.s32 4294967266, %v372
      %v378 = vadd.s32 %v377, 127
      %v379 = vshll.u32 %v378, 23
      %v380 = vor.u32 4788187, %v379
      %v381 = vand.u32 2147483647, %v380
      %v383 = vcvt.s32.f32 %v376
      %v384 = vmul.f32 %v383, %v381
      %v385 = vxor.u32 %v384, 2147483648
      %v386 = vsel %vm303, %v385, %v384
      %v387 = vsub.s32 4, %v363
      %v388 = vsel %vm303, %v387, %v363
      %v389 = vsel %vm302, %v197, %v386
      %v390 = vsel %vm302, 0, %v388
      %v391 = vcosq.f32.pop %v389
      %v392 = vsinq.f32.pop %v389
      %vm393 = vweird.f32 %v197
      %v394 = vadd.s32 %v390, 3
      %v395 = vand.u32 %v394, 3
      %vm396 = vcmp.lt.s32.totalorder %v395, 2
      %vm397 = vcmp.eq.s32.totalorder %v395, 0
      %v398 = vxor.u32 %v392, 2147483648
      %v399 = vsel %vm397, %v391, %v398
      %vm400 = vcmp.eq.s32.totalorder %v395, 2
      %v401 = vxor.u32 %v391, 2147483648
      %v402 = vsel %vm400, %v401, %v392
      %v403 = vsel %vm396, %v399, %v402
      %v404 = vsel %vm393, nan, %v403
      %v405 = vmul.f32 %v183, %v300
      %407 = vrot.lane.b32.xlu0 %v404, 16
      %v408 = vpop.permute.xlu0 %407
      %v410 = vmul.f32 %v183, %v408
      %412 = vrot.lane.b32.xlu0 %v410, 112
      %v413 = vpop.permute.xlu0 %412
      %v415 = vsub.f32 %v405, %v413
      %417 = vrot.lane.b32.xlu0 %v300, 16
      %v418 = vpop.permute.xlu0 %417
      %v420 = vmul.f32 %v183, %v418
      %v421 = vmul.f32 %v183, %v404
      %423 = vrot.lane.b32.xlu0 %v421, 16
      %v424 = vpop.permute.xlu0 %423
      %v426 = vadd.f32 %v420, %v424
      %vm427 = vcmask 130048
      %v428 = vsel %vm427, %v415, %v426
      %vm429 = vcmask 261120
      %430 = vst.msk [vmem:[%s182] sm:$0xff] %vm429, %v428
      %p431 = scmp.lt.s32.totalorder %s14, 1
      %s432 = scalar_select %p431, %s14, 1
      %s433 = smul.addr %s432, 8
      %s434 = scalar_lea.vmem %s3, %s433
      // Predicated region
      $region33: #{rotary_positional_embedding_1d.1} parent=31 // pred_check
        %p435 = pneg %p105
      $region34: #{rotary_positional_embedding_1d.1} parent=31 // pred_check_branch
        %437 = sbr.rel (%p435) target = $region36
      $region35: #{rotary_positional_embedding_1d.1} parent=31 // pred_region
        _
      $region36: #{rotary_positional_embedding_1d.1} parent=31 // pred_fallthru
        _
    $region32: #{rotary_positional_embedding_1d.1} parent=5 // pred_fallthru
      _
    %p438 = scmp.le.s32.totalorder 2, %s9
    // Predicated region
    $region37: #{rotary_positional_embedding_1d.1} parent=5 // pred_check
      %p439 = pneg %p438
    $region38: #{rotary_positional_embedding_1d.1} parent=5 // pred_check_branch
      %441 = sbr.rel (%p439) target = $region40
    $region39: #{rotary_positional_embedding_1d.1} parent=5 // pred_region
      %s442 = ssub.s32 %s9, 2
      // Predicated region
      $region41: #{rotary_positional_embedding_1d.1} parent=39 // pred_check
        %p443 = pneg %p111
      $region42: #{rotary_positional_embedding_1d.1} parent=39 // pred_check_branch
        %445 = sbr.rel (%p443) target = $region44
      $region43: #{rotary_positional_embedding_1d.1} parent=39 // pred_region
        %p446 = scmp.lt.s32.totalorder %s15, 1
        %s447 = scalar_select %p446, %s15, 1
        %s448 = smul.addr %s447, 8
        %s449 = scalar_lea.vmem %s3, %s448
      $region44: #{rotary_positional_embedding_1d.1} parent=39 // pred_fallthru
        _
    $region40: #{rotary_positional_embedding_1d.1} parent=5 // pred_fallthru
      _
  $region6: #{rotary_positional_embedding_1d.1} parent=0 // loop_footer
    %s13 = sadd.s32 1, %s9
  $region7: #{rotary_positional_embedding_1d.1} parent=0 // loop_footer_branch
    %8 = sbr.rel target = $region3
  $region8: #{rotary_positional_embedding_1d.1} parent=0 // loop_exit
    _

</llo_original>
